<compile_context>
chip_gen: v7x
topology: tpu7x:2x2x1
jax: 0.10.0
libtpu: 0.0.40
codegen_flags: <defaults>
</compile_context>

<pallas_src>
import functools

import jax
import jax.numpy as jnp
from jax.experimental import pallas as pl
from jax.experimental.pallas import tpu as pltpu


def _decomp_kernel(x_ref, res_ref, mean_ref, xpad_ref, *, kernel_size, pad):
    # x_ref:    (bt, L, ct)            un-padded input tile
    # res_ref:  (bt, L, ct)            residual   = x - moving_mean
    # mean_ref: (bt, L, ct)            moving_mean (avg pool, stride 1)
    # xpad_ref: (bt, L + 2*pad, ct)    f32 VMEM scratch for the replication-padded tile
    bt, L, ct = x_ref.shape
    x = x_ref[...].astype(jnp.float32)

    # Replication padding (torch.cat([front, x, end])) assembled entirely in VMEM.
    xpad_ref[:, pad:pad + L, :] = x
    if pad > 0:
        xpad_ref[:, 0:pad, :] = jnp.broadcast_to(x[:, 0:1, :], (bt, pad, ct))
        xpad_ref[:, pad + L:pad + L + pad, :] = jnp.broadcast_to(
            x[:, L - 1:L, :], (bt, pad, ct))

    # Sliding-window sum: k static shifted adds (VPU work, hidden under the DMA).
    acc = jnp.zeros((bt, L, ct), jnp.float32)
    for i in range(kernel_size):
        acc = acc + xpad_ref[:, i:i + L, :]
    mean = acc * (1.0 / kernel_size)

    mean_ref[...] = mean.astype(mean_ref.dtype)
    res_ref[...] = (x - mean).astype(res_ref.dtype)  # f32 subtract, single cast


def _choose_tiles(B, L, C, pad, itemsize):
    """Pick (batch_tile, channel_tile) that are lane-dense and VMEM-safe."""
    vmem_budget = 8 * 1024 * 1024   # conservative: fits v5e's 16 MiB scoped default

    def bytes_per_batch(ct):
        # (1 input + 2 outputs) double-buffered + the f32 padded scratch.
        return (L * ct * itemsize * 6) + ((L + 2 * pad) * ct * 4)

    # Channel tile: a multiple of 128 (lane-dense, unmasked stores) when C allows,
    # otherwise the full channel dim (allowed since block dim == array dim).
    if C % 128 == 0:
        c_tile = 128
        while (c_tile * 2 <= 512 and C % (c_tile * 2) == 0
               and bytes_per_batch(c_tile * 2) <= vmem_budget):
            c_tile *= 2
    else:
        c_tile = C

    # Batch tile: fold batches per grid step (amortize per-step overhead, target a
    # few hundred sublane rows) while staying inside the VMEM budget.
    per_batch = bytes_per_batch(c_tile)
    row_target = 1024
    b_tile = 1
    for bt in range(2, B + 1):
        if B % bt != 0:
            continue
        if bt * per_batch > vmem_budget:
            break
        b_tile = bt
        if bt * L >= row_target:
            break

    # If even a single-batch block overshoots the conservative budget (very long L
    # with narrow C), ask Mosaic for a larger scoped-VMEM limit instead of failing.
    vmem_limit = None
    need = b_tile * per_batch
    if need > vmem_budget:
        vmem_limit = min(int(need * 1.25) + (1 << 20), 100 * 1024 * 1024)
    return b_tile, c_tile, vmem_limit


def series_decomp(x, kernel_size):
    """Returns (res, moving_mean), matching the PyTorch series_decomp.forward."""
    B, L, C = x.shape
    # The PyTorch module is only shape-consistent for odd kernel_size (stride=1).
    assert kernel_size % 2 == 1, "series_decomp assumes an odd kernel_size"
    pad = (kernel_size - 1) // 2

    b_tile, c_tile, vmem_limit = _choose_tiles(B, L, C, pad, x.dtype.itemsize)
    grid = (B // b_tile, C // c_tile)
    block = (b_tile, L, c_tile)

    # Full L per block: typical time-series lengths (<= a few thousand) fit easily.
    # TODO(synk): for very long sequences, tile L with a manual halo DMA
    # (memory_space=pl.ANY + make_async_copy) instead of full-L Blocked specs.
    kernel = functools.partial(_decomp_kernel, kernel_size=kernel_size, pad=pad)

    res, mean = pl.pallas_call(
        kernel,
        out_shape=(
            jax.ShapeDtypeStruct((B, L, C), x.dtype),
            jax.ShapeDtypeStruct((B, L, C), x.dtype),
        ),
        grid=grid,
        in_specs=[pl.BlockSpec(block, lambda b, c: (b, 0, c))],
        out_specs=(
            pl.BlockSpec(block, lambda b, c: (b, 0, c)),
            pl.BlockSpec(block, lambda b, c: (b, 0, c)),
        ),
        scratch_shapes=[pltpu.VMEM((b_tile, L + 2 * pad, c_tile), jnp.float32)],
        compiler_params=pltpu.CompilerParams(
            dimension_semantics=("parallel", "parallel"),
            vmem_limit_bytes=vmem_limit),
    )(x)
    return res, mean


def _reference(x, kernel_size):
    """Pure-JAX reference replicating the PyTorch semantics."""
    pad = (kernel_size - 1) // 2
    front = jnp.repeat(x[:, 0:1, :], pad, axis=1)
    end = jnp.repeat(x[:, -1:, :], pad, axis=1)
    xpad = jnp.concatenate([front, x, end], axis=1)
    L_out = xpad.shape[1] - kernel_size + 1
    windows = jnp.stack(
        [xpad[:, i:i + L_out, :] for i in range(kernel_size)], axis=0)
    mean = jnp.mean(windows, axis=0)
    return x - mean, mean


if __name__ == "__main__":
    key = jax.random.PRNGKey(0)

    # Case 1: small time-series shape (narrow channels -> full-C blocks).
    x1 = jax.random.normal(key, (2, 16, 8), dtype=jnp.float32)
    res1, mean1 = series_decomp(x1, 5)
    jax.block_until_ready((res1, mean1))
    rref1, mref1 = _reference(x1, 5)
    assert res1.shape == x1.shape and mean1.shape == x1.shape
    assert jnp.allclose(mean1, mref1, atol=1e-5, rtol=1e-5)
    assert jnp.allclose(res1, rref1, atol=1e-5, rtol=1e-5)

    # Case 2: lane-dense / channel-tiled path (C a multiple of 128).
    x2 = jax.random.normal(key, (4, 16, 256), dtype=jnp.float32)
    res2, mean2 = series_decomp(x2, 5)
    jax.block_until_ready((res2, mean2))
    rref2, mref2 = _reference(x2, 5)
    assert jnp.allclose(mean2, mref2, atol=1e-5, rtol=1e-5)
    assert jnp.allclose(res2, rref2, atol=1e-5, rtol=1e-5)

    # Case 3: sublane-unaligned L and odd channel count (ETT-style), larger window.
    x3 = jax.random.normal(key, (3, 30, 7), dtype=jnp.float32)
    res3, mean3 = series_decomp(x3, 7)
    jax.block_until_ready((res3, mean3))
    rref3, mref3 = _reference(x3, 7)
    assert jnp.allclose(mean3, mref3, atol=1e-5, rtol=1e-5)
    assert jnp.allclose(res3, rref3, atol=1e-5, rtol=1e-5)

    print("KERNEL_OK")
</pallas_src>

<mosaic_0001>
module attributes {stable_mosaic.version = 11 : i64} {
  func.func @_decomp_kernel(%arg0: i32, %arg1: i32, %arg2: memref<2x16x8xf32, #tpu.memory_space<vmem>>, %arg3: memref<2x16x8xf32, #tpu.memory_space<vmem>>, %arg4: memref<2x16x8xf32, #tpu.memory_space<vmem>>, %arg5: memref<2x20x8xf32, #tpu.memory_space<vmem>>) attributes {dimension_semantics = [#tpu.dimension_semantics<parallel>, #tpu.dimension_semantics<parallel>], iteration_bounds = array<i64: 1, 1>, scalar_prefetch = 0 : i64, scratch_operands = 1 : i64, tpu.core_type = #tpu.core_type<tc>, window_params = [{transform_indices = @transform_0, window_bounds = array<i64: 2, 16, 8>}, {transform_indices = @transform_1, window_bounds = array<i64: 2, 16, 8>}, {transform_indices = @transform_2, window_bounds = array<i64: 2, 16, 8>}]} {
    %c0 = arith.constant 0 : index
    %c0_0 = arith.constant 0 : index
    %c0_1 = arith.constant 0 : index
    %0 = vector.load %arg2[%c0, %c0_0, %c0_1] : memref<2x16x8xf32, #tpu.memory_space<vmem>>, vector<2x16x8xf32>
    %c0_2 = arith.constant 0 : index
    %c2 = arith.constant 2 : index
    %c0_3 = arith.constant 0 : index
    %1 = vector.load %arg5[%c0_2, %c2, %c0_3] : memref<2x20x8xf32, #tpu.memory_space<vmem>>, vector<2x16x8xf32>
    tpu.vector_store %arg5[%c0_2, %c2, %c0_3], %0 {strides = array<i32>} : memref<2x20x8xf32, #tpu.memory_space<vmem>>, vector<2x16x8xf32>,
    %2 = vector.extract_strided_slice %0 {offsets = [0, 0, 0], sizes = [2, 1, 8], strides = [1, 1, 1]} : vector<2x16x8xf32> to vector<2x1x8xf32>
    %3 = vector.shape_cast %2 : vector<2x1x8xf32> to vector<2x1x8xf32>
    %4 = vector.broadcast %3 : vector<2x1x8xf32> to vector<2x2x8xf32>
    %c0_4 = arith.constant 0 : index
    %c0_5 = arith.constant 0 : index
    %c0_6 = arith.constant 0 : index
    %5 = vector.load %arg5[%c0_4, %c0_5, %c0_6] : memref<2x20x8xf32, #tpu.memory_space<vmem>>, vector<2x2x8xf32>
    tpu.vector_store %arg5[%c0_4, %c0_5, %c0_6], %4 {strides = array<i32>} : memref<2x20x8xf32, #tpu.memory_space<vmem>>, vector<2x2x8xf32>,
    %6 = vector.extract_strided_slice %0 {offsets = [0, 15, 0], sizes = [2, 1, 8], strides = [1, 1, 1]} : vector<2x16x8xf32> to vector<2x1x8xf32>
    %7 = vector.shape_cast %6 : vector<2x1x8xf32> to vector<2x1x8xf32>
    %8 = vector.broadcast %7 : vector<2x1x8xf32> to vector<2x2x8xf32>
    %c0_7 = arith.constant 0 : index
    %c18 = arith.constant 18 : index
    %c0_8 = arith.constant 0 : index
    %9 = vector.load %arg5[%c0_7, %c18, %c0_8] : memref<2x20x8xf32, #tpu.memory_space<vmem>>, vector<2x2x8xf32>
    tpu.vector_store %arg5[%c0_7, %c18, %c0_8], %8 {strides = array<i32>} : memref<2x20x8xf32, #tpu.memory_space<vmem>>, vector<2x2x8xf32>,
    %cst = arith.constant 0.000000e+00 : f32
    %10 = vector.broadcast %cst : f32 to vector<2x16x8xf32>
    %c0_9 = arith.constant 0 : index
    %c0_10 = arith.constant 0 : index
    %c0_11 = arith.constant 0 : index
    %11 = vector.load %arg5[%c0_9, %c0_10, %c0_11] : memref<2x20x8xf32, #tpu.memory_space<vmem>>, vector<2x16x8xf32>
    %12 = arith.addf %10, %11 : vector<2x16x8xf32>
    %c0_12 = arith.constant 0 : index
    %c1 = arith.constant 1 : index
    %c0_13 = arith.constant 0 : index
    %13 = vector.load %arg5[%c0_12, %c1, %c0_13] : memref<2x20x8xf32, #tpu.memory_space<vmem>>, vector<2x16x8xf32>
    %14 = arith.addf %12, %13 : vector<2x16x8xf32>
    %c0_14 = arith.constant 0 : index
    %c2_15 = arith.constant 2 : index
    %c0_16 = arith.constant 0 : index
    %15 = vector.load %arg5[%c0_14, %c2_15, %c0_16] : memref<2x20x8xf32, #tpu.memory_space<vmem>>, vector<2x16x8xf32>
    %16 = arith.addf %14, %15 : vector<2x16x8xf32>
    %c0_17 = arith.constant 0 : index
    %c3 = arith.constant 3 : index
    %c0_18 = arith.constant 0 : index
    %17 = vector.load %arg5[%c0_17, %c3, %c0_18] : memref<2x20x8xf32, #tpu.memory_space<vmem>>, vector<2x16x8xf32>
    %18 = arith.addf %16, %17 : vector<2x16x8xf32>
    %c0_19 = arith.constant 0 : index
    %c4 = arith.constant 4 : index
    %c0_20 = arith.constant 0 : index
    %19 = vector.load %arg5[%c0_19, %c4, %c0_20] : memref<2x20x8xf32, #tpu.memory_space<vmem>>, vector<2x16x8xf32>
    %20 = arith.addf %18, %19 : vector<2x16x8xf32>
    %cst_21 = arith.constant 2.000000e-01 : f32
    %21 = vector.broadcast %cst_21 : f32 to vector<2x16x8xf32>
    %22 = arith.mulf %20, %21 : vector<2x16x8xf32>
    %c0_22 = arith.constant 0 : index
    %c0_23 = arith.constant 0 : index
    %c0_24 = arith.constant 0 : index
    %23 = vector.load %arg4[%c0_22, %c0_23, %c0_24] : memref<2x16x8xf32, #tpu.memory_space<vmem>>, vector<2x16x8xf32>
    tpu.vector_store %arg4[%c0_22, %c0_23, %c0_24], %22 {strides = array<i32>} : memref<2x16x8xf32, #tpu.memory_space<vmem>>, vector<2x16x8xf32>,
    %24 = arith.subf %0, %22 : vector<2x16x8xf32>
    %c0_25 = arith.constant 0 : index
    %c0_26 = arith.constant 0 : index
    %c0_27 = arith.constant 0 : index
    %25 = vector.load %arg3[%c0_25, %c0_26, %c0_27] : memref<2x16x8xf32, #tpu.memory_space<vmem>>, vector<2x16x8xf32>
    tpu.vector_store %arg3[%c0_25, %c0_26, %c0_27], %24 {strides = array<i32>} : memref<2x16x8xf32, #tpu.memory_space<vmem>>, vector<2x16x8xf32>,
    return
  }
  func.func @transform_0(%arg0: i32, %arg1: i32) -> (i32, i32, i32) {
    %c0_i32 = arith.constant 0 : i32
    %c0_i32_0 = arith.constant 0 : i32
    return %arg0, %c0_i32, %arg1 : i32, i32, i32
  }
  func.func @transform_1(%arg0: i32, %arg1: i32) -> (i32, i32, i32) {
    %c0_i32 = arith.constant 0 : i32
    %c0_i32_0 = arith.constant 0 : i32
    return %arg0, %c0_i32, %arg1 : i32, i32, i32
  }
  func.func @transform_2(%arg0: i32, %arg1: i32) -> (i32, i32, i32) {
    %c0_i32 = arith.constant 0 : i32
    %c0_i32_0 = arith.constant 0 : i32
    return %arg0, %c0_i32, %arg1 : i32, i32, i32
  }
}

</mosaic_0001>

<llo_original>
// kernel: tpu_custom_call.1
$region0: #{tpu_custom_call.1}
  #allocation0 [shape = 'u32[]', space=smem, size = 0x4, offset = 0x4, fixed_abs, tag = 'smem constant byte address 0x4 - core index']
  #allocation1 [shape = 'u32[144,128]{1,0:T(1,128)}', space=vmem, size = 0x12000, scoped, tag = 'internal scratch']
  #allocation2 [shape = 'f32[2,20,8]{2,1,0:T(8,128)}', space=vmem, size = 0x6000, scoped, tag = 'scratch operand']
  %s0 = inlined_call_operand.vmem [shape: f32[2,16,8], index: 0, kind: input, shape index: {}]
  %s1 = inlined_call_operand.vmem [shape: f32[2,16,8], index: 1, kind: output, shape index: {0}]
  %s2 = inlined_call_operand.vmem [shape: f32[2,16,8], index: 2, kind: output, shape index: {1}]
  %3 = xla_tuple %s1, %s2
  %s4 = sld [smem:[#allocation0]]
  $region22: #{tpu_custom_call.1} parent=0
    _
  %s6 = ssub.s32 1, %s4
  %s7 = scalar_select 0, %s6, %s4
  // Predicated region
  $region2: #{tpu_custom_call.1} parent=0 // pred_check
    _
  $region3: #{tpu_custom_call.1} parent=0 // pred_check_branch
    %9 = sbr.rel (0) target = $region5
  $region4: #{tpu_custom_call.1} parent=0 // pred_region
    _
  $region5: #{tpu_custom_call.1} parent=0 // pred_fallthru
    _
  %v10 = vld [vmem:[%s0] sm:$0xff]
  %v11 = vld [vmem:[%s0 + $0x8] sm:$0xff]
  %v12 = vld [vmem:[%s0 + $0x10] sm:$0xff]
  %v13 = vld [vmem:[%s0 + $0x18] sm:$0xff]
  %vm14 = vcmask 64512
  %15 = vst.msk [vmem:[#allocation2 + $0x2] sm:$0xff] %vm14, %v10
  %16 = vst.msk [vmem:[#allocation2 + $0xa] sm:$0xff] %vm14, %v11
  %17 = vst.msk [vmem:[#allocation2 + $0x1a] sm:$0xff] %vm14, %v12
  %18 = vst.msk [vmem:[#allocation2 + $0x22] sm:$0xff] %vm14, %v13
  %v19 = vlaneseq
  %v20 = vshrl.u32 %v19, 7
  %v21 = vsub.s32 0, %v20
  %v22 = vrot.slane %v10, %v21
  %v23 = vlaneseq
  %v24 = vshrl.u32 %v23, 7
  %v25 = vsub.s32 0, %v24
  %v26 = vrot.slane %v12, %v25
  %vm27 = vcmask 58368
  %28 = vst.msk [vmem:[#allocation2] sm:$0x3] %vm27, %v22
  %29 = vst.msk [vmem:[#allocation2 + $0x18] sm:$0x3] %vm27, %v26
  %v30 = vlaneseq
  %v31 = vshrl.u32 %v30, 7
  %v32 = vsub.s32 7, %v31
  %v33 = vrot.slane %v11, %v32
  %v34 = vlaneseq
  %v35 = vshrl.u32 %v34, 7
  %v36 = vsub.s32 7, %v35
  %v37 = vrot.slane %v13, %v36
  %38 = vst.msk [vmem:[#allocation2 + $0x12] sm:$0x3] %vm27, %v33
  %39 = vst.msk [vmem:[#allocation2 + $0x2a] sm:$0x3] %vm27, %v37
  %v40 = vld [vmem:[#allocation2] sm:$0xff]
  %v41 = vld [vmem:[#allocation2 + $0x8] sm:$0xff]
  %v42 = vld [vmem:[#allocation2 + $0x18] sm:$0xff]
  %v43 = vld [vmem:[#allocation2 + $0x20] sm:$0xff]
  %v44 = vadd.f32 %v40, 0.0
  %v45 = vadd.f32 %v41, 0.0
  %v46 = vadd.f32 %v42, 0.0
  %v47 = vadd.f32 %v43, 0.0
  %v48 = vld [vmem:[#allocation2 + $0x1] sm:$0xff]
  %v49 = vld [vmem:[#allocation2 + $0x9] sm:$0xff]
  %v50 = vld [vmem:[#allocation2 + $0x19] sm:$0xff]
  %v51 = vld [vmem:[#allocation2 + $0x21] sm:$0xff]
  %v52 = vadd.f32 %v44, %v48
  %v53 = vadd.f32 %v45, %v49
  %v54 = vadd.f32 %v46, %v50
  %v55 = vadd.f32 %v47, %v51
  %v56 = vld [vmem:[#allocation2 + $0x2] sm:$0xff]
  %v57 = vld [vmem:[#allocation2 + $0xa] sm:$0xff]
  %v58 = vld [vmem:[#allocation2 + $0x1a] sm:$0xff]
  %v59 = vld [vmem:[#allocation2 + $0x22] sm:$0xff]
  %v60 = vadd.f32 %v52, %v56
  %v61 = vadd.f32 %v53, %v57
  %v62 = vadd.f32 %v54, %v58
  %v63 = vadd.f32 %v55, %v59
  %v64 = vld [vmem:[#allocation2 + $0x3] sm:$0xff]
  %v65 = vld [vmem:[#allocation2 + $0xb] sm:$0xff]
  %v66 = vld [vmem:[#allocation2 + $0x1b] sm:$0xff]
  %v67 = vld [vmem:[#allocation2 + $0x23] sm:$0xff]
  %v68 = vadd.f32 %v60, %v64
  %v69 = vadd.f32 %v61, %v65
  %v70 = vadd.f32 %v62, %v66
  %v71 = vadd.f32 %v63, %v67
  %v72 = vld [vmem:[#allocation2 + $0x4] sm:$0xff]
  %v73 = vld [vmem:[#allocation2 + $0xc] sm:$0xff]
  %v74 = vld [vmem:[#allocation2 + $0x1c] sm:$0xff]
  %v75 = vld [vmem:[#allocation2 + $0x24] sm:$0xff]
  %v76 = vadd.f32 %v68, %v72
  %v77 = vadd.f32 %v69, %v73
  %v78 = vadd.f32 %v70, %v74
  %v79 = vadd.f32 %v71, %v75
  %v80 = vmul.f32 %v76, 0.2
  %v81 = vmul.f32 %v77, 0.2
  %v82 = vmul.f32 %v78, 0.2
  %v83 = vmul.f32 %v79, 0.2
  %84 = vst.msk [vmem:[%s2] sm:$0xff] %vm14, %v80
  %85 = vst.msk [vmem:[%s2 + $0x8] sm:$0xff] %vm14, %v81
  %86 = vst.msk [vmem:[%s2 + $0x10] sm:$0xff] %vm14, %v82
  %87 = vst.msk [vmem:[%s2 + $0x18] sm:$0xff] %vm14, %v83
  %v88 = vsub.f32 %v10, %v80
  %v89 = vsub.f32 %v11, %v81
  %v90 = vsub.f32 %v12, %v82
  %v91 = vsub.f32 %v13, %v83
  %92 = vst.msk [vmem:[%s1] sm:$0xff] %vm14, %v88
  %93 = vst.msk [vmem:[%s1 + $0x8] sm:$0xff] %vm14, %v89
  %94 = vst.msk [vmem:[%s1 + $0x10] sm:$0xff] %vm14, %v90
  %95 = vst.msk [vmem:[%s1 + $0x18] sm:$0xff] %vm14, %v91
  // Predicated region
  $region6: #{tpu_custom_call.1} parent=0 // pred_check
    _
  $region7: #{tpu_custom_call.1} parent=0 // pred_check_branch
    %97 = sbr.rel (0) target = $region9
  $region8: #{tpu_custom_call.1} parent=0 // pred_region
    _
  $region9: #{tpu_custom_call.1} parent=0 // pred_fallthru
    _
  // Predicated region
  $region10: #{tpu_custom_call.1} parent=0 // pred_check
    _
  $region11: #{tpu_custom_call.1} parent=0 // pred_check_branch
    %99 = sbr.rel (0) target = $region13
  $region12: #{tpu_custom_call.1} parent=0 // pred_region
    _
  $region13: #{tpu_custom_call.1} parent=0 // pred_fallthru
    _
  // Predicated region
  $region14: #{tpu_custom_call.1} parent=0 // pred_check
    _
  $region15: #{tpu_custom_call.1} parent=0 // pred_check_branch
    %101 = sbr.rel (0) target = $region17
  $region16: #{tpu_custom_call.1} parent=0 // pred_region
    _
  $region17: #{tpu_custom_call.1} parent=0 // pred_fallthru
    _
  // Predicated region
  $region18: #{tpu_custom_call.1} parent=0 // pred_check
    _
  $region19: #{tpu_custom_call.1} parent=0 // pred_check_branch
    %103 = sbr.rel (0) target = $region21
  $region20: #{tpu_custom_call.1} parent=0 // pred_region
    _
  $region21: #{tpu_custom_call.1} parent=0 // pred_fallthru
    _

</llo_original>
